<compile_context>
chip_gen: v7x
topology: tpu7x:2x2x1
jax: 0.10.0
libtpu: 0.0.40
codegen_flags: <defaults>
</compile_context>

<pallas_src>
import functools

import numpy as np
import jax
import jax.numpy as jnp
from jax import lax
from jax.experimental import pallas as pl
from jax.experimental.pallas import tpu as pltpu

_EPS = 1e-5


# --------------------------------------------------------------------------
# Pass A: y1 = conv1x1(relu(BN1(x)))  +  per-tile f32 stats of y1 (for BN2).
# --------------------------------------------------------------------------
def _bn_relu_mm_stats_kernel(x_ref, scale_ref, shift_ref, w_ref, b_ref,
                             y_ref, sum_ref, sq_ref):
    h = jnp.maximum(x_ref[...].astype(jnp.float32) * scale_ref[...]
                    + shift_ref[...], 0.0)
    y = jnp.dot(h.astype(w_ref.dtype), w_ref[...],
                preferred_element_type=jnp.float32) + b_ref[...]
    # Stats from the f32 value *before* the (possibly bf16) downcast.
    sum_ref[0] = jnp.sum(y, axis=0, keepdims=True)
    sq_ref[0] = jnp.sum(y * y, axis=0, keepdims=True)
    y_ref[...] = y.astype(y_ref.dtype)


# --------------------------------------------------------------------------
# Pass B: y2 = conv3x3(relu(BN2(y1))), row-block tiled with a 1-row halo.
# --------------------------------------------------------------------------
def _bn_relu_conv3x3_kernel(top_ref, ctr_ref, bot_ref, scale_ref, shift_ref,
                            w2_ref, b2_ref, y2_ref, sum_ref, sq_ref, pad_ref,
                            *, W, TR, PADB):
    R = TR * W
    ch = ctr_ref.shape[-1]
    r = pl.program_id(1)
    last_r = pl.num_programs(1) - 1

    def act(v2d):                      # BN2 + ReLU in f32, downcast for MXU
        a = jnp.maximum(v2d.astype(jnp.float32) * scale_ref[...]
                        + shift_ref[...], 0.0)
        return a.astype(pad_ref.dtype)

    # Flat, statically-sliceable scratch:
    #   [ pad | top halo (W) | center (TR*W) | bottom halo (W) | pad ]
    # Halo rows are zeroed at image top/bottom borders.
    top = act(top_ref[0, 0]) * (r > 0).astype(pad_ref.dtype)
    bot = act(bot_ref[0, 0]) * (r < last_r).astype(pad_ref.dtype)
    pad_ref[pl.ds(PADB - W, W), :] = top
    pad_ref[pl.ds(PADB + R, W), :] = bot
    # TODO(synk): the (TR, W, ch)->(TR*W, ch) reshape is free only for W % 8 == 0;
    # odd W relies on Mosaic relayout copies.
    pad_ref[pl.ds(PADB, R), :] = act(ctr_ref[0].reshape(R, ch))

    # dx-major im2col: the three dx=-1 / dx=+1 taps are contiguous column
    # groups, so one edge select per group handles the left/right borders
    # (it also kills the only two reads of uninitialised pad rows).
    def tap(dx, dy):
        return pad_ref[pl.ds(PADB + dy * W + dx, R), :]

    xw = lax.broadcasted_iota(jnp.int32, (R, 1), 0) % W
    g_m = jnp.concatenate([tap(-1, -1), tap(-1, 0), tap(-1, 1)], axis=1)
    g_c = jnp.concatenate([tap(0, -1), tap(0, 0), tap(0, 1)], axis=1)
    g_p = jnp.concatenate([tap(1, -1), tap(1, 0), tap(1, 1)], axis=1)
    g_m = jnp.where(xw > 0, g_m, jnp.zeros_like(g_m))
    g_p = jnp.where(xw < W - 1, g_p, jnp.zeros_like(g_p))
    patch = jnp.concatenate([g_m, g_c, g_p], axis=1)          # (R, 9*ch)

    # TODO(synk): if VMEM/vreg pressure shows up on v7x, swap the fused im2col
    # matmul for 9 per-tap (R,ch)@(ch,ch) matmuls accumulated in f32.
    y = jnp.dot(patch, w2_ref[...],
                preferred_element_type=jnp.float32) + b2_ref[...]
    sum_ref[0, 0] = jnp.sum(y, axis=0, keepdims=True)
    sq_ref[0, 0] = jnp.sum(y * y, axis=0, keepdims=True)
    y2_ref[...] = y.astype(y2_ref.dtype).reshape(1, TR, W, ch)


# --------------------------------------------------------------------------
# Pass C: out = skip(x) + conv1x1(relu(BN3(y2)))
# --------------------------------------------------------------------------
def _final_kernel(x_ref, y2_ref, scale_ref, shift_ref, w3_ref, b3_ref,
                  wskip_ref, bskip_ref, o_ref, *, use_conv_skip):
    h = jnp.maximum(y2_ref[...].astype(jnp.float32) * scale_ref[...]
                    + shift_ref[...], 0.0)
    y = jnp.dot(h.astype(w3_ref.dtype), w3_ref[...],
                preferred_element_type=jnp.float32) + b3_ref[...]
    if use_conv_skip:
        skip = jnp.dot(x_ref[...].astype(wskip_ref.dtype), wskip_ref[...],
                       preferred_element_type=jnp.float32) + bskip_ref[...]
    else:
        skip = x_ref[...].astype(jnp.float32)
    o_ref[...] = skip + y


# --------------------------------------------------------------------------
# Helpers
# --------------------------------------------------------------------------
def _choose_tile_m(M, target):
    """Multiple-of-8 row tile that exactly divides M, close to `target`."""
    if M % 8 != 0:
        # TODO(synk): ragged / padded tiling for M not divisible by 8.
        return M
    target = max(8, min(M, target))
    best_below = None
    for cand in range((target // 8) * 8, 7, -8):
        if M % cand == 0:
            best_below = cand
            break
    if best_below is not None and (best_below >= 256 or best_below * 4 >= target):
        return best_below
    # Largest divisor <= target is degenerate: try a modest divisor above it
    # so we neither crawl at 8-row tiles nor blow VMEM with one giant block.
    cap = min(M, 16 * target)
    cand = (target // 8 + 1) * 8
    while cand <= cap:
        if M % cand == 0:
            return cand
        cand += 8
    return best_below if best_below is not None else M


def _choose_rows(H, W, N, target_rows):
    """Row-block height TR for the 3x3 pass; TR divides H."""
    tr = max(1, min(H, target_rows))
    if N == 1 and H >= 2:          # keep >=2 blocks so both v7x TCs get work
        tr = min(tr, max(1, H // 2))
    while tr > 1 and H % tr != 0:
        tr -= 1
    return tr


def _full_spec(arr, grid_rank):
    nd = arr.ndim
    zeros = (0,) * nd
    if grid_rank == 1:
        return pl.BlockSpec(arr.shape, lambda i: zeros)
    return pl.BlockSpec(arr.shape, lambda i, j: zeros)


def _fold_bn(sums, sqs, count, gamma, beta):
    """One-pass stats -> folded per-channel scale/shift (f32)."""
    # TODO(synk): Welford/shifted variance if BN inputs can have large means.
    mean = sums / count
    var = sqs / count - mean * mean          # biased variance (PyTorch training BN)
    scale = gamma * lax.rsqrt(var + _EPS)
    shift = beta - mean * scale
    return (scale.reshape(1, -1).astype(jnp.float32),
            shift.reshape(1, -1).astype(jnp.float32))


@functools.lru_cache(maxsize=None)
def _vmem_limit_bytes():
    try:
        cap = int(pltpu.get_tpu_info().vmem_capacity_bytes)
        return max(32 * 1024 * 1024, min(cap * 3 // 4, 96 * 1024 * 1024))
    except Exception:
        return 48 * 1024 * 1024             # safe on v5e/v6e/v7x


def _cparams(sem):
    return pltpu.CompilerParams(dimension_semantics=sem,
                                vmem_limit_bytes=_vmem_limit_bytes())


# --------------------------------------------------------------------------
# Wrapper
# --------------------------------------------------------------------------
def res_module_pallas(x_nchw, params, in_channels, out_channels,
                      *, tile_m=4096, mm_dtype=jnp.bfloat16):
    N, Cin, H, W = x_nchw.shape
    assert Cin == in_channels
    ch = out_channels // 2
    M = N * H * W
    use_conv_skip = (in_channels != out_channels)
    store_dtype = jnp.float32 if np.dtype(mm_dtype) == np.float32 else mm_dtype

    # NCHW -> (M, C) flattened NHWC; BN1 stats fuse with the transpose in XLA.
    x2d_f32 = jnp.transpose(x_nchw, (0, 2, 3, 1)).reshape(M, Cin).astype(jnp.float32)
    s1 = jnp.sum(x2d_f32, axis=0)
    q1 = jnp.sum(x2d_f32 * x2d_f32, axis=0)
    scale1, shift1 = _fold_bn(s1, q1, M, params["g1"], params["be1"])
    x2d = x2d_f32.astype(store_dtype)

    def row(v):
        return v.reshape(1, -1).astype(jnp.float32)

    # MXU operands in mm_dtype; biases / BN params stay f32.
    wskip = params["w_skip"][:, :, 0, 0].T.astype(mm_dtype)             # (Cin, Cout)
    w1 = params["w1"][:, :, 0, 0].T.astype(mm_dtype)                    # (Cin, ch)
    # dx-major (kw, kh, cin, cout) row order to match the in-kernel tap order.
    w2 = jnp.transpose(params["w2"], (3, 2, 1, 0)).reshape(9 * ch, ch).astype(mm_dtype)
    w3 = params["w3"][:, :, 0, 0].T.astype(mm_dtype)                    # (ch, Cout)
    bskip, b1, b2, b3 = (row(params["b_skip"]), row(params["b1"]),
                         row(params["b2"]), row(params["b3"]))

    TM = _choose_tile_m(M, tile_m)
    nT = M // TM

    # ---- Pass A: BN1 + ReLU + 1x1 conv, stats for BN2 ----------------------
    y1, s2, q2 = pl.pallas_call(
        _bn_relu_mm_stats_kernel,
        out_shape=(jax.ShapeDtypeStruct((M, ch), store_dtype),
                   jax.ShapeDtypeStruct((nT, 1, ch), jnp.float32),
                   jax.ShapeDtypeStruct((nT, 1, ch), jnp.float32)),
        grid_spec=pltpu.PrefetchScalarGridSpec(
            num_scalar_prefetch=0, grid=(nT,),
            in_specs=[pl.BlockSpec((TM, Cin), lambda i: (i, 0)),
                      _full_spec(scale1, 1), _full_spec(shift1, 1),
                      _full_spec(w1, 1), _full_spec(b1, 1)],
            out_specs=(pl.BlockSpec((TM, ch), lambda i: (i, 0)),
                       pl.BlockSpec((1, 1, ch), lambda i: (i, 0, 0)),
                       pl.BlockSpec((1, 1, ch), lambda i: (i, 0, 0)))),
        compiler_params=_cparams(("parallel",)),
    )(x2d, scale1, shift1, w1, b1)
    scale2, shift2 = _fold_bn(s2.sum((0, 1)), q2.sum((0, 1)), M,
                              params["g2"], params["be2"])

    # ---- Pass B: BN2 + ReLU + 3x3 conv, row blocks with 1-row halo ----------
    TR = _choose_rows(H, W, N, max(1, tile_m // max(W, 1)))
    nR = H // TR
    R = TR * W
    PADB = ((W + 1 + 7) // 8) * 8                 # >= W+1, sublane-aligned

    y1_4d = y1.reshape(N, H, W, ch)               # free reshape
    conv_kernel = functools.partial(_bn_relu_conv3x3_kernel,
                                    W=W, TR=TR, PADB=PADB)
    y2, s3, q3 = pl.pallas_call(
        conv_kernel,
        out_shape=(jax.ShapeDtypeStruct((N, H, W, ch), store_dtype),
                   jax.ShapeDtypeStruct((N, nR, 1, ch), jnp.float32),
                   jax.ShapeDtypeStruct((N, nR, 1, ch), jnp.float32)),
        grid_spec=pltpu.PrefetchScalarGridSpec(
            num_scalar_prefetch=0, grid=(N, nR),
            in_specs=[
                # halo row above (clamped at the image top; zeroed in-kernel)
                pl.BlockSpec((1, 1, W, ch),
                             lambda n, r: (n, jnp.maximum(r * TR - 1, 0), 0, 0)),
                # center rows of this block
                pl.BlockSpec((1, TR, W, ch), lambda n, r: (n, r, 0, 0)),
                # halo row below (clamped at the image bottom; zeroed in-kernel)
                pl.BlockSpec((1, 1, W, ch),
                             lambda n, r: (n, jnp.minimum(r * TR + TR, H - 1), 0, 0)),
                _full_spec(scale2, 2), _full_spec(shift2, 2),
                _full_spec(w2, 2), _full_spec(b2, 2)],
            out_specs=(pl.BlockSpec((1, TR, W, ch), lambda n, r: (n, r, 0, 0)),
                       pl.BlockSpec((1, 1, 1, ch), lambda n, r: (n, r, 0, 0)),
                       pl.BlockSpec((1, 1, 1, ch), lambda n, r: (n, r, 0, 0))),
            scratch_shapes=[pltpu.VMEM((2 * PADB + R, ch), mm_dtype)]),
        compiler_params=_cparams(("parallel", "parallel")),
    )(y1_4d, y1_4d, y1_4d, scale2, shift2, w2, b2)
    scale3, shift3 = _fold_bn(s3.sum((0, 1, 2)), q3.sum((0, 1, 2)), M,
                              params["g3"], params["be3"])

    # ---- Pass C: BN3 + ReLU + 1x1 conv + skip -------------------------------
    y2r = y2.reshape(M, ch)                       # free reshape
    final_kernel = functools.partial(_final_kernel, use_conv_skip=use_conv_skip)
    out2d = pl.pallas_call(
        final_kernel,
        out_shape=jax.ShapeDtypeStruct((M, out_channels), jnp.float32),
        grid_spec=pltpu.PrefetchScalarGridSpec(
            num_scalar_prefetch=0, grid=(nT,),
            in_specs=[pl.BlockSpec((TM, Cin), lambda i: (i, 0)),
                      pl.BlockSpec((TM, ch), lambda i: (i, 0)),
                      _full_spec(scale3, 1), _full_spec(shift3, 1),
                      _full_spec(w3, 1), _full_spec(b3, 1),
                      _full_spec(wskip, 1), _full_spec(bskip, 1)],
            out_specs=pl.BlockSpec((TM, out_channels), lambda i: (i, 0))),
        compiler_params=_cparams(("parallel",)),
    )(x2d, y2r, scale3, shift3, w3, b3, wskip, bskip)

    return jnp.transpose(out2d.reshape(N, H, W, out_channels), (0, 3, 1, 2))


# --------------------------------------------------------------------------
# Parameter init (PyTorch-default-style) and pure-JAX NCHW reference.
# --------------------------------------------------------------------------
def init_res_module_params(key, in_channels, out_channels):
    ch = out_channels // 2
    keys = jax.random.split(key, 4)

    def conv_params(k, co, ci, kh, kw):
        fan_in = ci * kh * kw
        bound = 1.0 / np.sqrt(fan_in)
        k_w, k_b = jax.random.split(k)
        w = jax.random.uniform(k_w, (co, ci, kh, kw), jnp.float32, -bound, bound)
        b = jax.random.uniform(k_b, (co,), jnp.float32, -bound, bound)
        return w, b

    p = {}
    p["w_skip"], p["b_skip"] = conv_params(keys[0], out_channels, in_channels, 1, 1)
    p["w1"], p["b1"] = conv_params(keys[1], ch, in_channels, 1, 1)
    p["w2"], p["b2"] = conv_params(keys[2], ch, ch, 3, 3)
    p["w3"], p["b3"] = conv_params(keys[3], out_channels, ch, 1, 1)
    p["g1"] = jnp.ones((in_channels,), jnp.float32)
    p["be1"] = jnp.zeros((in_channels,), jnp.float32)
    p["g2"] = jnp.ones((ch,), jnp.float32)
    p["be2"] = jnp.zeros((ch,), jnp.float32)
    p["g3"] = jnp.ones((ch,), jnp.float32)
    p["be3"] = jnp.zeros((ch,), jnp.float32)
    return p


def res_module_ref(x, params, in_channels, out_channels):
    """Pure-JAX NCHW reference matching the PyTorch forward (training-mode BN)."""
    def conv1x1(y, w, b):
        return jnp.einsum('nchw,oc->nohw', y, w[:, :, 0, 0]) + b[None, :, None, None]

    def bn(y, g, b):
        mean = y.mean(axis=(0, 2, 3), keepdims=True)
        var = ((y - mean) ** 2).mean(axis=(0, 2, 3), keepdims=True)
        return (y - mean) / jnp.sqrt(var + _EPS) * g[None, :, None, None] \
            + b[None, :, None, None]

    if in_channels != out_channels:
        skip = conv1x1(x, params["w_skip"], params["b_skip"])
    else:
        skip = x
    y = jax.nn.relu(bn(x, params["g1"], params["be1"]))
    y = conv1x1(y, params["w1"], params["b1"])
    y = jax.nn.relu(bn(y, params["g2"], params["be2"]))
    y = lax.conv_general_dilated(y, params["w2"], (1, 1), ((1, 1), (1, 1)),
                                 dimension_numbers=('NCHW', 'OIHW', 'NCHW'))
    y = y + params["b2"][None, :, None, None]
    y = jax.nn.relu(bn(y, params["g3"], params["be3"]))
    y = conv1x1(y, params["w3"], params["b3"])
    return skip + y


if __name__ == "__main__":
    key = jax.random.PRNGKey(0)
    kx, kp1, kp2 = jax.random.split(key, 3)

    # Case 1: in_channels != out_channels -> conv_skip path.
    N, Cin, Cout, Hs, Ws = 2, 4, 8, 16, 16
    x = jax.random.normal(kx, (N, Cin, Hs, Ws), jnp.float32)
    params = init_res_module_params(kp1, Cin, Cout)
    ref = res_module_ref(x, params, Cin, Cout)

    # f32 path (tile_m=128 -> 4-step streaming grid, 2x2 grid for the 3x3 pass
    # so inter-block halos are exercised), tight tolerance.
    out_f32 = jax.block_until_ready(
        res_module_pallas(x, params, Cin, Cout, tile_m=128, mm_dtype=jnp.float32))
    assert out_f32.shape == (N, Cout, Hs, Ws)
    np.testing.assert_allclose(np.asarray(out_f32), np.asarray(ref),
                               rtol=2e-4, atol=2e-4)

    # bf16 MXU operands + bf16-stored x/y1/y2 (fast path); BN math stays f32.
    out_bf16 = jax.block_until_ready(
        res_module_pallas(x, params, Cin, Cout, tile_m=128, mm_dtype=jnp.bfloat16))
    np.testing.assert_allclose(np.asarray(out_bf16), np.asarray(ref),
                               rtol=6e-2, atol=6e-2)

    # Case 2: in_channels == out_channels -> identity skip.
    params2 = init_res_module_params(kp2, Cout, Cout)
    x2 = jax.random.normal(kx, (N, Cout, Hs, Ws), jnp.float32)
    ref2 = res_module_ref(x2, params2, Cout, Cout)
    out2 = jax.block_until_ready(
        res_module_pallas(x2, params2, Cout, Cout, tile_m=128, mm_dtype=jnp.float32))
    np.testing.assert_allclose(np.asarray(out2), np.asarray(ref2),
                               rtol=2e-4, atol=2e-4)

    print("KERNEL_OK")
</pallas_src>

<mosaic_0001>
module attributes {stable_mosaic.version = 11 : i64} {
  func.func @_bn_relu_mm_stats_kernel(%arg0: i32, %arg1: memref<128x4xf32, #tpu.memory_space<vmem>>, %arg2: memref<1x4xf32, #tpu.memory_space<vmem>>, %arg3: memref<1x4xf32, #tpu.memory_space<vmem>>, %arg4: memref<4x4xf32, #tpu.memory_space<vmem>>, %arg5: memref<1x4xf32, #tpu.memory_space<vmem>>, %arg6: memref<128x4xf32, #tpu.memory_space<vmem>>, %arg7: memref<1x1x4xf32, #tpu.memory_space<vmem>>, %arg8: memref<1x1x4xf32, #tpu.memory_space<vmem>>) attributes {dimension_semantics = [#tpu.dimension_semantics<parallel>], iteration_bounds = array<i64: 4>, scalar_prefetch = 0 : i64, scratch_operands = 0 : i64, tpu.core_type = #tpu.core_type<tc>, window_params = [{transform_indices = @transform_0, window_bounds = array<i64: 128, 4>}, {pipeline_mode = #tpu.pipeline_mode<synchronous>, transform_indices = @transform_1, window_bounds = array<i64: 1, 4>}, {pipeline_mode = #tpu.pipeline_mode<synchronous>, transform_indices = @transform_2, window_bounds = array<i64: 1, 4>}, {pipeline_mode = #tpu.pipeline_mode<synchronous>, transform_indices = @transform_3, window_bounds = array<i64: 4, 4>}, {pipeline_mode = #tpu.pipeline_mode<synchronous>, transform_indices = @transform_4, window_bounds = array<i64: 1, 4>}, {transform_indices = @transform_5, window_bounds = array<i64: 128, 4>}, {transform_indices = @transform_6, window_bounds = array<i64: 1, 1, 4>}, {transform_indices = @transform_7, window_bounds = array<i64: 1, 1, 4>}]} {
    %c0 = arith.constant 0 : index
    %c0_0 = arith.constant 0 : index
    %0 = vector.load %arg1[%c0, %c0_0] : memref<128x4xf32, #tpu.memory_space<vmem>>, vector<128x4xf32>
    %c0_1 = arith.constant 0 : index
    %c0_2 = arith.constant 0 : index
    %1 = vector.load %arg2[%c0_1, %c0_2] : memref<1x4xf32, #tpu.memory_space<vmem>>, vector<1x4xf32>
    %2 = vector.broadcast %1 : vector<1x4xf32> to vector<128x4xf32>
    %3 = arith.mulf %0, %2 : vector<128x4xf32>
    %c0_3 = arith.constant 0 : index
    %c0_4 = arith.constant 0 : index
    %4 = vector.load %arg3[%c0_3, %c0_4] : memref<1x4xf32, #tpu.memory_space<vmem>>, vector<1x4xf32>
    %5 = vector.broadcast %4 : vector<1x4xf32> to vector<128x4xf32>
    %6 = arith.addf %3, %5 : vector<128x4xf32>
    %cst = arith.constant 0.000000e+00 : f32
    %7 = vector.broadcast %cst : f32 to vector<128x4xf32>
    %8 = arith.maximumf %6, %7 : vector<128x4xf32>
    %c0_5 = arith.constant 0 : index
    %c0_6 = arith.constant 0 : index
    %9 = vector.load %arg4[%c0_5, %c0_6] : memref<4x4xf32, #tpu.memory_space<vmem>>, vector<4x4xf32>
    %cst_7 = arith.constant dense<0.000000e+00> : vector<128x4xf32>
    %10 = tpu.matmul %8, %9, %cst_7 {dimension_numbers = #tpu.dot_dimension_numbers<[1], [0], [0], [1], [0, 0, 1, 1], [], []>} : vector<128x4xf32>, vector<4x4xf32>, vector<128x4xf32> -> vector<128x4xf32>
    %c0_8 = arith.constant 0 : index
    %c0_9 = arith.constant 0 : index
    %11 = vector.load %arg5[%c0_8, %c0_9] : memref<1x4xf32, #tpu.memory_space<vmem>>, vector<1x4xf32>
    %12 = vector.broadcast %11 : vector<1x4xf32> to vector<128x4xf32>
    %13 = arith.addf %10, %12 : vector<128x4xf32>
    %cst_10 = arith.constant dense<0.000000e+00> : vector<4xf32>
    %14 = vector.multi_reduction <add>, %13, %cst_10 [0] : vector<128x4xf32> to vector<4xf32>
    %15 = vector.shape_cast %14 : vector<4xf32> to vector<1x4xf32>
    %c0_11 = arith.constant 0 : index
    %c0_12 = arith.constant 0 : index
    %c0_13 = arith.constant 0 : index
    %16 = vector.load %arg7[%c0_11, %c0_12, %c0_13] : memref<1x1x4xf32, #tpu.memory_space<vmem>>, vector<1x1x4xf32>
    %17 = vector.shape_cast %16 : vector<1x1x4xf32> to vector<1x4xf32>
    %18 = vector.shape_cast %15 : vector<1x4xf32> to vector<1x1x4xf32>
    tpu.vector_store %arg7[%c0_11, %c0_12, %c0_13], %18 {strides = array<i32>} : memref<1x1x4xf32, #tpu.memory_space<vmem>>, vector<1x1x4xf32>,
    %19 = arith.mulf %13, %13 : vector<128x4xf32>
    %cst_14 = arith.constant dense<0.000000e+00> : vector<4xf32>
    %20 = vector.multi_reduction <add>, %19, %cst_14 [0] : vector<128x4xf32> to vector<4xf32>
    %21 = vector.shape_cast %20 : vector<4xf32> to vector<1x4xf32>
    %c0_15 = arith.constant 0 : index
    %c0_16 = arith.constant 0 : index
    %c0_17 = arith.constant 0 : index
    %22 = vector.load %arg8[%c0_15, %c0_16, %c0_17] : memref<1x1x4xf32, #tpu.memory_space<vmem>>, vector<1x1x4xf32>
    %23 = vector.shape_cast %22 : vector<1x1x4xf32> to vector<1x4xf32>
    %24 = vector.shape_cast %21 : vector<1x4xf32> to vector<1x1x4xf32>
    tpu.vector_store %arg8[%c0_15, %c0_16, %c0_17], %24 {strides = array<i32>} : memref<1x1x4xf32, #tpu.memory_space<vmem>>, vector<1x1x4xf32>,
    %c0_18 = arith.constant 0 : index
    %c0_19 = arith.constant 0 : index
    %25 = vector.load %arg6[%c0_18, %c0_19] : memref<128x4xf32, #tpu.memory_space<vmem>>, vector<128x4xf32>
    tpu.vector_store %arg6[%c0_18, %c0_19], %13 {strides = array<i32>} : memref<128x4xf32, #tpu.memory_space<vmem>>, vector<128x4xf32>,
    return
  }
  func.func @transform_0(%arg0: i32) -> (i32, i32) {
    %c0_i32 = arith.constant 0 : i32
    %c0_i32_0 = arith.constant 0 : i32
    return %arg0, %c0_i32 : i32, i32
  }
  func.func @transform_1(%arg0: i32) -> (i32, i32) {
    %c0_i32 = arith.constant 0 : i32
    %c0_i32_0 = arith.constant 0 : i32
    %c0_i32_1 = arith.constant 0 : i32
    return %c0_i32, %c0_i32_0 : i32, i32
  }
  func.func @transform_2(%arg0: i32) -> (i32, i32) {
    %c0_i32 = arith.constant 0 : i32
    %c0_i32_0 = arith.constant 0 : i32
    %c0_i32_1 = arith.constant 0 : i32
    return %c0_i32, %c0_i32_0 : i32, i32
  }
  func.func @transform_3(%arg0: i32) -> (i32, i32) {
    %c0_i32 = arith.constant 0 : i32
    %c0_i32_0 = arith.constant 0 : i32
    %c0_i32_1 = arith.constant 0 : i32
    return %c0_i32, %c0_i32_0 : i32, i32
  }
  func.func @transform_4(%arg0: i32) -> (i32, i32) {
    %c0_i32 = arith.constant 0 : i32
    %c0_i32_0 = arith.constant 0 : i32
    %c0_i32_1 = arith.constant 0 : i32
    return %c0_i32, %c0_i32_0 : i32, i32
  }
  func.func @transform_5(%arg0: i32) -> (i32, i32) {
    %c0_i32 = arith.constant 0 : i32
    %c0_i32_0 = arith.constant 0 : i32
    return %arg0, %c0_i32 : i32, i32
  }
  func.func @transform_6(%arg0: i32) -> (i32, i32, i32) {
    %c0_i32 = arith.constant 0 : i32
    %c0_i32_0 = arith.constant 0 : i32
    %c0_i32_1 = arith.constant 0 : i32
    return %arg0, %c0_i32, %c0_i32_0 : i32, i32, i32
  }
  func.func @transform_7(%arg0: i32) -> (i32, i32, i32) {
    %c0_i32 = arith.constant 0 : i32
    %c0_i32_0 = arith.constant 0 : i32
    %c0_i32_1 = arith.constant 0 : i32
    return %arg0, %c0_i32, %c0_i32_0 : i32, i32, i32
  }
}

</mosaic_0001>

<llo_original>
// kernel: tpu_custom_call.1
$region0: #{tpu_custom_call.1}
  #allocation0 [shape = 'u32[]', space=smem, size = 0x4, offset = 0x4, fixed_abs, tag = 'smem constant byte address 0x4 - core index']
  #allocation1 [shape = 'u32[144,128]{1,0:T(1,128)}', space=vmem, size = 0x12000, scoped, tag = 'internal scratch']
  %s0 = inlined_call_operand.vmem [shape: f32[512,4], index: 0, kind: input, shape index: {}]
  %s1 = inlined_call_operand.vmem [shape: f32[1,4], index: 1, kind: input, shape index: {}]
  %s2 = inlined_call_operand.vmem [shape: f32[1,4], index: 2, kind: input, shape index: {}]
  %s3 = inlined_call_operand.vmem [shape: f32[4,4], index: 3, kind: input, shape index: {}]
  %s4 = inlined_call_operand.vmem [shape: f32[1,4], index: 4, kind: input, shape index: {}]
  %s5 = inlined_call_operand.vmem [shape: f32[512,4], index: 5, kind: output, shape index: {0}]
  %s6 = inlined_call_operand.hbm [shape: f32[4,1,4], index: 6, kind: output, shape index: {1}]
  %s7 = inlined_call_operand.hbm [shape: f32[4,1,4], index: 7, kind: output, shape index: {2}]
  %8 = xla_tuple %s5, %s6, %s7
  %s9 = sld [smem:[#allocation0]]
  $region69: #{tpu_custom_call.1} parent=0
    _
  %s11 = ssub.s32 1, %s9
  %s12 = scalar_select 0, %s11, %s9
  $region1: #{tpu_custom_call.1} parent=0
    #allocation2 [shape = 'u8[1024]{0}', space=vmem, size = 0x400, scoped, tag = 'output window, operand 1']
    #allocation3 [shape = 's32[2]{0}', space=sflag, size = 0x8, scoped, tag = 'scoped memory for tpu_custom_call.1']
    #allocation4 [shape = 'u8[1024]{0}', space=vmem, size = 0x400, scoped, tag = 'output window, operand 2']
    #allocation5 [shape = 's32[2]{0}', space=sflag, size = 0x8, scoped, tag = 'scoped memory for tpu_custom_call.1']
    %13 = vsyncpa [#allocation3], 0
    %s14 = scalar_lea.sflag [#allocation3], 1
    %15 = vsyncpa %s14, 0
    %16 = vsyncpa [#allocation5], 0
    %s17 = scalar_lea.sflag [#allocation5], 1
    %18 = vsyncpa %s17, 0
    loop: start=0, step=1, limit=6
    $region2: #{tpu_custom_call.1} parent=1 // loop_pre_header
      _
    $region3: #{tpu_custom_call.1} parent=1 // loop_header
      %s20 = sphi 0, %s24
      %p21 = scmp.ge.s32.totalorder %s20, 6
      %s30 = sphi 0, %s32
      %s33 = sphi 0, %s30
      %s34 = sphi 0, %s33
      %s50 = sphi 0, %s34
      %s54 = sphi 0, %s54
      %s56 = sphi 0, %s54
      %s57 = sphi 0, %s56
      %s71 = sphi 0, %s57
      %s75 = sphi 0, %s75
      %s77 = sphi 0, %s75
      %s78 = sphi 0, %s77
      %s92 = sphi 0, %s78
      %s96 = sphi 0, %s96
      %s98 = sphi 0, %s96
      %s99 = sphi 0, %s98
      %s113 = sphi 0, %s99
      %s117 = sphi 0, %s117
      %s119 = sphi 0, %s117
      %s120 = sphi 0, %s119
      %s134 = sphi 0, %s120
      %s140 = sphi 0, %s142
      %s143 = sphi 0, %s140
      %s144 = sphi 0, %s143
      %s160 = sphi 0, %s144
      %s166 = sphi 0, %s168
      %s169 = sphi 0, %s166
      %s170 = sphi 0, %s169
      %s186 = sphi 0, %s170
      %s192 = sphi 0, %s194
      %s195 = sphi 0, %s192
      %s196 = sphi 0, %s195
      %s212 = sphi 0, %s196
    $region4: #{tpu_custom_call.1} parent=1 // loop_header_branch
      %23 = sbr.rel (%p21) target = $region8
    $region5: #{tpu_custom_call.1} parent=1 // loop_body
      %s25 = ssub.s32 %s20, 1
      %s26 = ssub.s32 %s20, 2
      %s27 = sadd.s32 %s20, 1
      %s28 = ssub.s32 %s20, %s27
      %p29 = scmp.eq.s32.totalorder %s28, 0
      %s31 = sadd.s32 %s30, 1
      %s32 = scalar_select %p29, %s30, %s31
      %p35 = pneg %p29
      %p36 = scmp.eq.s32.totalorder %s20, 3
      %p37 = por %p35, %p36
      %p38 = scmp.ne.s32.totalorder %s30, %s33
      %p39 = scmp.eq.s32.totalorder %s20, 0
      %p40 = por %p38, %p39
      %p41 = scmp.ne.s32.totalorder %s30, %s33
      %p42 = scmp.eq.s32.totalorder %s25, 3
      %p43 = por %p41, %p42
      %p44 = scmp.ne.s32.totalorder %s33, %s34
      %p45 = scmp.eq.s32.totalorder %s25, 0
      %p46 = por %p44, %p45
      %p47 = scmp.ne.s32.totalorder %s33, %s34
      %p48 = scmp.eq.s32.totalorder %s26, 3
      %p49 = por %p47, %p48
      %p51 = scmp.ne.s32.totalorder %s34, %s50
      %p52 = scmp.eq.s32.totalorder %s26, 0
      %p53 = por %p51, %p52
      %s55 = sadd.s32 %s54, 1
      %p58 = scmp.eq.s32.totalorder %s20, 3
      %p59 = scmp.ne.s32.totalorder %s54, %s56
      %p60 = scmp.eq.s32.totalorder %s20, 0
      %p61 = por %p59, %p60
      %p62 = scmp.ne.s32.totalorder %s54, %s56
      %p63 = scmp.eq.s32.totalorder %s25, 3
      %p64 = por %p62, %p63
      %p65 = scmp.ne.s32.totalorder %s56, %s57
      %p66 = scmp.eq.s32.totalorder %s25, 0
      %p67 = por %p65, %p66
      %p68 = scmp.ne.s32.totalorder %s56, %s57
      %p69 = scmp.eq.s32.totalorder %s26, 3
      %p70 = por %p68, %p69
      %p72 = scmp.ne.s32.totalorder %s57, %s71
      %p73 = scmp.eq.s32.totalorder %s26, 0
      %p74 = por %p72, %p73
      %s76 = sadd.s32 %s75, 1
      %p79 = scmp.eq.s32.totalorder %s20, 3
      %p80 = scmp.ne.s32.totalorder %s75, %s77
      %p81 = scmp.eq.s32.totalorder %s20, 0
      %p82 = por %p80, %p81
      %p83 = scmp.ne.s32.totalorder %s75, %s77
      %p84 = scmp.eq.s32.totalorder %s25, 3
      %p85 = por %p83, %p84
      %p86 = scmp.ne.s32.totalorder %s77, %s78
      %p87 = scmp.eq.s32.totalorder %s25, 0
      %p88 = por %p86, %p87
      %p89 = scmp.ne.s32.totalorder %s77, %s78
      %p90 = scmp.eq.s32.totalorder %s26, 3
      %p91 = por %p89, %p90
      %p93 = scmp.ne.s32.totalorder %s78, %s92
      %p94 = scmp.eq.s32.totalorder %s26, 0
      %p95 = por %p93, %p94
      %s97 = sadd.s32 %s96, 1
      %p100 = scmp.eq.s32.totalorder %s20, 3
      %p101 = scmp.ne.s32.totalorder %s96, %s98
      %p102 = scmp.eq.s32.totalorder %s20, 0
      %p103 = por %p101, %p102
      %p104 = scmp.ne.s32.totalorder %s96, %s98
      %p105 = scmp.eq.s32.totalorder %s25, 3
      %p106 = por %p104, %p105
      %p107 = scmp.ne.s32.totalorder %s98, %s99
      %p108 = scmp.eq.s32.totalorder %s25, 0
      %p109 = por %p107, %p108
      %p110 = scmp.ne.s32.totalorder %s98, %s99
      %p111 = scmp.eq.s32.totalorder %s26, 3
      %p112 = por %p110, %p111
      %p114 = scmp.ne.s32.totalorder %s99, %s113
      %p115 = scmp.eq.s32.totalorder %s26, 0
      %p116 = por %p114, %p115
      %s118 = sadd.s32 %s117, 1
      %p121 = scmp.eq.s32.totalorder %s20, 3
      %p122 = scmp.ne.s32.totalorder %s117, %s119
      %p123 = scmp.eq.s32.totalorder %s20, 0
      %p124 = por %p122, %p123
      %p125 = scmp.ne.s32.totalorder %s117, %s119
      %p126 = scmp.eq.s32.totalorder %s25, 3
      %p127 = por %p125, %p126
      %p128 = scmp.ne.s32.totalorder %s119, %s120
      %p129 = scmp.eq.s32.totalorder %s25, 0
      %p130 = por %p128, %p129
      %p131 = scmp.ne.s32.totalorder %s119, %s120
      %p132 = scmp.eq.s32.totalorder %s26, 3
      %p133 = por %p131, %p132
      %p135 = scmp.ne.s32.totalorder %s120, %s134
      %p136 = scmp.eq.s32.totalorder %s26, 0
      %p137 = por %p135, %p136
      %s138 = ssub.s32 %s20, %s27
      %p139 = scmp.eq.s32.totalorder %s138, 0
      %s141 = sadd.s32 %s140, 1
      %s142 = scalar_select %p139, %s140, %s141
      %p145 = pneg %p139
      %p146 = scmp.eq.s32.totalorder %s20, 3
      %p147 = por %p145, %p146
      %p148 = scmp.ne.s32.totalorder %s140, %s143
      %p149 = scmp.eq.s32.totalorder %s20, 0
      %p150 = por %p148, %p149
      %p151 = scmp.ne.s32.totalorder %s140, %s143
      %p152 = scmp.eq.s32.totalorder %s25, 3
      %p153 = por %p151, %p152
      %p154 = scmp.ne.s32.totalorder %s143, %s144
      %p155 = scmp.eq.s32.totalorder %s25, 0
      %p156 = por %p154, %p155
      %p157 = scmp.ne.s32.totalorder %s143, %s144
      %p158 = scmp.eq.s32.totalorder %s26, 3
      %p159 = por %p157, %p158
      %p161 = scmp.ne.s32.totalorder %s144, %s160
      %p162 = scmp.eq.s32.totalorder %s26, 0
      %p163 = por %p161, %p162
      %s164 = ssub.s32 %s20, %s27
      %p165 = scmp.eq.s32.totalorder %s164, 0
      %s167 = sadd.s32 %s166, 1
      %s168 = scalar_select %p165, %s166, %s167
      %p171 = pneg %p165
      %p172 = scmp.eq.s32.totalorder %s20, 3
      %p173 = por %p171, %p172
      %p174 = scmp.ne.s32.totalorder %s166, %s169
      %p175 = scmp.eq.s32.totalorder %s20, 0
      %p176 = por %p174, %p175
      %p177 = scmp.ne.s32.totalorder %s166, %s169
      %p178 = scmp.eq.s32.totalorder %s25, 3
      %p179 = por %p177, %p178
      %p180 = scmp.ne.s32.totalorder %s169, %s170
      %p181 = scmp.eq.s32.totalorder %s25, 0
      %p182 = por %p180, %p181
      %p183 = scmp.ne.s32.totalorder %s169, %s170
      %p184 = scmp.eq.s32.totalorder %s26, 3
      %p185 = por %p183, %p184
      %p187 = scmp.ne.s32.totalorder %s170, %s186
      %p188 = scmp.eq.s32.totalorder %s26, 0
      %p189 = por %p187, %p188
      %s190 = ssub.s32 %s20, %s27
      %p191 = scmp.eq.s32.totalorder %s190, 0
      %s193 = sadd.s32 %s192, 1
      %s194 = scalar_select %p191, %s192, %s193
      %p197 = pneg %p191
      %p198 = scmp.eq.s32.totalorder %s20, 3
      %p199 = por %p197, %p198
      %p200 = scmp.ne.s32.totalorder %s192, %s195
      %p201 = scmp.eq.s32.totalorder %s20, 0
      %p202 = por %p200, %p201
      %p203 = scmp.ne.s32.totalorder %s192, %s195
      %p204 = scmp.eq.s32.totalorder %s25, 3
      %p205 = por %p203, %p204
      %p206 = scmp.ne.s32.totalorder %s195, %s196
      %p207 = scmp.eq.s32.totalorder %s25, 0
      %p208 = por %p206, %p207
      %p209 = scmp.ne.s32.totalorder %s195, %s196
      %p210 = scmp.eq.s32.totalorder %s26, 3
      %p211 = por %p209, %p210
      %p213 = scmp.ne.s32.totalorder %s196, %s212
      %p214 = scmp.eq.s32.totalorder %s26, 0
      %p215 = por %p213, %p214
      %p216 = scmp.le.s32.totalorder 1, %s20
      %p217 = scmp.lt.s32.totalorder %s20, 5
      %p218 = pnand %p216, %p217
      %p219 = pneg %p218
      // Predicated region
      $region9: #{tpu_custom_call.1} parent=5 // pred_check
        _
      $region10: #{tpu_custom_call.1} parent=5 // pred_check_branch
        %221 = sbr.rel (%p218) target = $region12
      $region11: #{tpu_custom_call.1} parent=5 // pred_region
        %s222 = ssub.s32 %s20, 1
        // Predicated region
        $region13: #{tpu_custom_call.1} parent=11 // pred_check
          %p223 = pneg %p67
        $region14: #{tpu_custom_call.1} parent=11 // pred_check_branch
          %225 = sbr.rel (%p223) target = $region16
        $region15: #{tpu_custom_call.1} parent=11 // pred_region
          _
        $region16: #{tpu_custom_call.1} parent=11 // pred_fallthru
          _
        // Predicated region
        $region17: #{tpu_custom_call.1} parent=11 // pred_check
          %p226 = pneg %p88
        $region18: #{tpu_custom_call.1} parent=11 // pred_check_branch
          %228 = sbr.rel (%p226) target = $region20
        $region19: #{tpu_custom_call.1} parent=11 // pred_region
          _
        $region20: #{tpu_custom_call.1} parent=11 // pred_fallthru
          _
        // Predicated region
        $region21: #{tpu_custom_call.1} parent=11 // pred_check
          %p229 = pneg %p109
        $region22: #{tpu_custom_call.1} parent=11 // pred_check_branch
          %231 = sbr.rel (%p229) target = $region24
        $region23: #{tpu_custom_call.1} parent=11 // pred_region
          _
        $region24: #{tpu_custom_call.1} parent=11 // pred_fallthru
          _
        // Predicated region
        $region25: #{tpu_custom_call.1} parent=11 // pred_check
          %p232 = pneg %p130
        $region26: #{tpu_custom_call.1} parent=11 // pred_check_branch
          %234 = sbr.rel (%p232) target = $region28
        $region27: #{tpu_custom_call.1} parent=11 // pred_region
          _
        $region28: #{tpu_custom_call.1} parent=11 // pred_fallthru
          _
      $region12: #{tpu_custom_call.1} parent=5 // pred_fallthru
        _
      %p235 = scmp.lt.s32.totalorder %s20, 4
      // Predicated region
      $region29: #{tpu_custom_call.1} parent=5 // pred_check
        %p236 = pneg %p235
      $region30: #{tpu_custom_call.1} parent=5 // pred_check_branch
        %238 = sbr.rel (%p236) target = $region32
      $region31: #{tpu_custom_call.1} parent=5 // pred_region
        // Predicated region
        $region33: #{tpu_custom_call.1} parent=31 // pred_check
          %p239 = pneg %p40
        $region34: #{tpu_custom_call.1} parent=31 // pred_check_branch
          %241 = sbr.rel (%p239) target = $region36
        $region35: #{tpu_custom_call.1} parent=31 // pred_region
          %s242 = smul.u32 16, %s20
          %p243 = scmp.lt.s32.totalorder %s242, 63
          %s244 = scalar_select %p243, %s242, 63
          %s245 = smul.addr %s244, 8
          %s246 = scalar_lea.vmem %s0, %s245
          %s247 = smul.u32 16, %s20
        $region36: #{tpu_custom_call.1} parent=31 // pred_fallthru
          _
      $region32: #{tpu_custom_call.1} parent=5 // pred_fallthru
        _
      %p248 = scmp.le.s32.totalorder 1, %s20
      %p249 = scmp.lt.s32.totalorder %s20, 5
      %p250 = pnand %p248, %p249
      %p251 = pneg %p250
      // Predicated region
      $region37: #{tpu_custom_call.1} parent=5 // pred_check
        _
      $region38: #{tpu_custom_call.1} parent=5 // pred_check_branch
        %253 = sbr.rel (%p250) target = $region40
      $region39: #{tpu_custom_call.1} parent=5 // pred_region
        %s254 = ssub.s32 %s20, 1
        %s255 = smul.u32 16, %s25
        %p256 = scmp.lt.s32.totalorder %s255, 63
        %s257 = scalar_select %p256, %s255, 63
        %s258 = smul.addr %s257, 8
        %s259 = scalar_lea.vmem %s0, %s258
        %p260 = pneg %p46
        %p261 = pneg %p43
        %p262 = pneg %p67
        %p263 = pneg %p64
        %p264 = pneg %p88
        %p265 = pneg %p85
        %p266 = pneg %p109
        %p267 = pneg %p106
        %p268 = pneg %p130
        %p269 = pneg %p127
        %p270 = pneg %p156
        %p271 = pneg %p153
        %s272 = smul.u32 16, %s25
        %p273 = scmp.lt.s32.totalorder %s272, 63
        %s274 = scalar_select %p273, %s272, 63
        %s275 = smul.addr %s274, 8
        %s276 = scalar_lea.vmem %s5, %s275
        %p277 = pneg %p182
        %p278 = pneg %p179
        %s279 = sand.u32 %s169, 1
        %s280 = scalar_lea.sflag [#allocation3], %s279
        %s281 = sand.u32 %s169, 1
        %s282 = scalar_lea.vmem [#allocation2], %s281
        %p283 = pneg %p208
        %p284 = pneg %p205
        %s285 = sand.u32 %s195, 1
        %s286 = scalar_lea.sflag [#allocation5], %s285
        %s287 = sand.u32 %s195, 1
        %s288 = scalar_lea.vmem [#allocation4], %s287
        %s289 = smul.u32 16, %s25
        %p290 = scmp.lt.s32.totalorder %s289, 63
        %s291 = scalar_select %p290, %s289, 63
        %s292 = smul.addr %s291, 8
        %s293 = scalar_lea.vmem %s0, %s292
        %s294 = smul.u32 16, %s25
        %s295 = smul.u32 16, %s25
        %p296 = scmp.lt.s32.totalorder %s295, 63
        %s297 = scalar_select %p296, %s295, 63
        %s298 = smul.addr %s297, 8
        %s299 = scalar_lea.vmem %s5, %s298
        %s300 = smul.u32 16, %s25
        %v301 = vld [vmem:[%s293] sm:$0xff]
        %v302 = vld [vmem:[%s293 + $0x8] sm:$0xff]
        %v303 = vld [vmem:[%s293 + $0x10] sm:$0xff]
        %v304 = vld [vmem:[%s293 + $0x18] sm:$0xff]
        %v305 = vld [vmem:[%s293 + $0x20] sm:$0xff]
        %v306 = vld [vmem:[%s293 + $0x28] sm:$0xff]
        %v307 = vld [vmem:[%s293 + $0x30] sm:$0xff]
        %v308 = vld [vmem:[%s293 + $0x38] sm:$0xff]
        %v309 = vld [vmem:[%s293 + $0x40] sm:$0xff]
        %v310 = vld [vmem:[%s293 + $0x48] sm:$0xff]
        %v311 = vld [vmem:[%s293 + $0x50] sm:$0xff]
        %v312 = vld [vmem:[%s293 + $0x58] sm:$0xff]
        %v313 = vld [vmem:[%s293 + $0x60] sm:$0xff]
        %v314 = vld [vmem:[%s293 + $0x68] sm:$0xff]
        %v315 = vld [vmem:[%s293 + $0x70] sm:$0xff]
        %v316 = vld [vmem:[%s293 + $0x78] sm:$0xff]
        %v317 = vld [vmem:[%s1] sm:$0x1]
        %v319 = vlaneseq
        %v320 = vshrl.u32 %v319, 7
        %v321 = vsub.s32 0, %v320
        %v322 = vrot.slane %v317, %v321
        %v324 = vmul.f32 %v301, %v322
        %v325 = vmul.f32 %v302, %v322
        %v326 = vmul.f32 %v303, %v322
        %v327 = vmul.f32 %v304, %v322
        %v328 = vmul.f32 %v305, %v322
        %v329 = vmul.f32 %v306, %v322
        %v330 = vmul.f32 %v307, %v322
        %v331 = vmul.f32 %v308, %v322
        %v332 = vmul.f32 %v309, %v322
        %v333 = vmul.f32 %v310, %v322
        %v334 = vmul.f32 %v311, %v322
        %v335 = vmul.f32 %v312, %v322
        %v336 = vmul.f32 %v313, %v322
        %v337 = vmul.f32 %v314, %v322
        %v338 = vmul.f32 %v315, %v322
        %v339 = vmul.f32 %v316, %v322
        %v340 = vld [vmem:[%s2] sm:$0x1]
        %v342 = vlaneseq
        %v343 = vshrl.u32 %v342, 7
        %v344 = vsub.s32 0, %v343
        %v345 = vrot.slane %v340, %v344
        %v347 = vadd.f32 %v324, %v345
        %v348 = vadd.f32 %v325, %v345
        %v349 = vadd.f32 %v326, %v345
        %v350 = vadd.f32 %v327, %v345
        %v351 = vadd.f32 %v328, %v345
        %v352 = vadd.f32 %v329, %v345
        %v353 = vadd.f32 %v330, %v345
        %v354 = vadd.f32 %v331, %v345
        %v355 = vadd.f32 %v332, %v345
        %v356 = vadd.f32 %v333, %v345
        %v357 = vadd.f32 %v334, %v345
        %v358 = vadd.f32 %v335, %v345
        %v359 = vadd.f32 %v336, %v345
        %v360 = vadd.f32 %v337, %v345
        %v361 = vadd.f32 %v338, %v345
        %v362 = vadd.f32 %v339, %v345
        %v363 = vmax.f32 %v347, 0.0
        %v364 = vmax.f32 %v348, 0.0
        %v365 = vmax.f32 %v349, 0.0
        %v366 = vmax.f32 %v350, 0.0
        %v367 = vmax.f32 %v351, 0.0
        %v368 = vmax.f32 %v352, 0.0
        %v369 = vmax.f32 %v353, 0.0
        %v370 = vmax.f32 %v354, 0.0
        %v371 = vmax.f32 %v355, 0.0
        %v372 = vmax.f32 %v356, 0.0
        %v373 = vmax.f32 %v357, 0.0
        %v374 = vmax.f32 %v358, 0.0
        %v375 = vmax.f32 %v359, 0.0
        %v376 = vmax.f32 %v360, 0.0
        %v377 = vmax.f32 %v361, 0.0
        %v378 = vmax.f32 %v362, 0.0
        %v379 = vld [vmem:[%s3] sm:$0xf]
        %v380 = vld [vmem:[%s4] sm:$0x1]
        %v382 = vlaneseq
        %v383 = vshrl.u32 %v382, 7
        %v384 = vsub.s32 0, %v383
        %v385 = vrot.slane %v380, %v384
        %vm387 = vcmask 31744
        %v389 = vsel %vm387, %v363, 0
        %v392 = vsel %vm387, %v364, 0
        %v395 = vsel %vm387, %v365, 0
        %v398 = vsel %vm387, %v366, 0
        %v401 = vsel %vm387, %v367, 0
        %v404 = vsel %vm387, %v368, 0
        %v407 = vsel %vm387, %v369, 0
        %v410 = vsel %vm387, %v370, 0
        %v413 = vsel %vm387, %v371, 0
        %v416 = vsel %vm387, %v372, 0
        %v419 = vsel %vm387, %v373, 0
        %v422 = vsel %vm387, %v374, 0
        %v425 = vsel %vm387, %v375, 0
        %v428 = vsel %vm387, %v376, 0
        %v431 = vsel %vm387, %v377, 0
        %v434 = vsel %vm387, %v378, 0
        %vm436 = vcmask 1043456
        %v438 = vsel %vm436, %v379, 0
        %440 = vmatprep.subr.mxu0 0.0
        %441 = vmatpush1.msra.mxu0 %v438
        %442 = vmatprep.subr.mxu0 0.0
        %443 = vmatpush1.msra.mxu0 0.0
        %444 = vmatprep.subr.mxu0 0.0
        %445 = vmatpush1.msra.mxu0 0.0
        %446 = vmatprep.subr.mxu0 0.0
        %447 = vmatpush1.msra.mxu0 0.0
        %448 = vmatprep.subr.mxu0 0.0
        %449 = vmatpush1.msra.mxu0 0.0
        %450 = vmatprep.subr.mxu0 0.0
        %451 = vmatpush1.msra.mxu0 0.0
        %452 = vmatprep.subr.mxu0 0.0
        %453 = vmatpush1.msra.mxu0 0.0
        %454 = vmatprep.subr.mxu0 0.0
        %455 = vmatpush1.msra.mxu0 0.0
        %456 = vmatprep.subr.mxu0 0.0
        %457 = vmatpush1.msra.mxu0 0.0
        %458 = vmatprep.subr.mxu0 0.0
        %459 = vmatpush1.msra.mxu0 0.0
        %460 = vmatprep.subr.mxu0 0.0
        %461 = vmatpush1.msra.mxu0 0.0
        %462 = vmatprep.subr.mxu0 0.0
        %463 = vmatpush1.msra.mxu0 0.0
        %464 = vmatprep.subr.mxu0 0.0
        %465 = vmatpush1.msra.mxu0 0.0
        %466 = vmatprep.subr.mxu0 0.0
        %467 = vmatpush1.msra.mxu0 0.0
        %468 = vmatprep.subr.mxu0 0.0
        %469 = vmatpush1.msra.mxu0 0.0
        %470 = vmatprep.subr.mxu0 0.0
        %471 = vmatpush1.msra.mxu0 0.0
        %472 = vmatprep.subr.mxu0 0.0
        %473 = vmatpush1.msra.mxu0 0.0
        %474 = vmatprep.subr.mxu0 0.0
        %475 = vmatpush1.msra.mxu0 0.0
        %476 = vmatprep.subr.mxu0 0.0
        %477 = vmatpush1.msra.mxu0 0.0
        %478 = vmatprep.subr.mxu0 0.0
        %479 = vmatpush1.msra.mxu0 0.0
        %480 = vmatprep.subr.mxu0 0.0
        %481 = vmatpush1.msra.mxu0 0.0
        %482 = vmatprep.subr.mxu0 0.0
        %483 = vmatpush1.msra.mxu0 0.0
        %484 = vmatprep.subr.mxu0 0.0
        %485 = vmatpush1.msra.mxu0 0.0
        %486 = vmatprep.subr.mxu0 0.0
        %487 = vmatpush1.msra.mxu0 0.0
        %488 = vmatprep.subr.mxu0 0.0
        %489 = vmatpush1.msra.mxu0 0.0
        %490 = vmatprep.subr.mxu0 0.0
        %491 = vmatpush1.msra.mxu0 0.0
        %492 = vmatprep.subr.mxu0 0.0
        %493 = vmatpush1.msra.mxu0 0.0
        %494 = vmatprep.subr.mxu0 0.0
        %495 = vmatpush1.msra.mxu0 0.0
        %496 = vmatprep.subr.mxu0 0.0
        %497 = vmatpush1.msra.mxu0 0.0
        %498 = vmatprep.subr.mxu0 0.0
        %499 = vmatpush1.msra.mxu0 0.0
        %500 = vmatprep.subr.mxu0 0.0
        %501 = vmatpush1.msra.mxu0 0.0
        %502 = vmatprep.subr.mxu0 0.0
        %503 = vmatpush1.msra.mxu0 0.0
        %504 = vmatprep.mubr.f32.mxu0 0.0
        %505 = vmatmul.mubr.f32.gmra.mrb[0].mxu0 %v389
        %v506 = vpop.f32.mrb[0].mxu0
        %v507 = vadd.f32 %v385, %v506
        %v508 = vpop.f32.mrb[0].mxu0
        %509 = vmatprep.mubr.f32.mxu0 0.0
        %510 = vmatmul.mubr.f32.gmra.mrb[0].mxu0 %v392
        %v511 = vpop.f32.mrb[0].mxu0
        %v512 = vadd.f32 %v385, %v511
        %v513 = vpop.f32.mrb[0].mxu0
        %514 = vmatprep.mubr.f32.mxu0 0.0
        %515 = vmatmul.mubr.f32.gmra.mrb[0].mxu0 %v395
        %v516 = vpop.f32.mrb[0].mxu0
        %v517 = vadd.f32 %v385, %v516
        %v518 = vpop.f32.mrb[0].mxu0
        %519 = vmatprep.mubr.f32.mxu0 0.0
        %520 = vmatmul.mubr.f32.gmra.mrb[0].mxu0 %v398
        %v521 = vpop.f32.mrb[0].mxu0
        %v522 = vadd.f32 %v385, %v521
        %v523 = vpop.f32.mrb[0].mxu0
        %524 = vmatprep.mubr.f32.mxu0 0.0
        %525 = vmatmul.mubr.f32.gmra.mrb[0].mxu0 %v401
        %v526 = vpop.f32.mrb[0].mxu0
        %v527 = vadd.f32 %v385, %v526
        %v528 = vpop.f32.mrb[0].mxu0
        %529 = vmatprep.mubr.f32.mxu0 0.0
        %530 = vmatmul.mubr.f32.gmra.mrb[0].mxu0 %v404
        %v531 = vpop.f32.mrb[0].mxu0
        %v532 = vadd.f32 %v385, %v531
        %v533 = vpop.f32.mrb[0].mxu0
        %534 = vmatprep.mubr.f32.mxu0 0.0
        %535 = vmatmul.mubr.f32.gmra.mrb[0].mxu0 %v407
        %v536 = vpop.f32.mrb[0].mxu0
        %v537 = vadd.f32 %v385, %v536
        %v538 = vpop.f32.mrb[0].mxu0
        %539 = vmatprep.mubr.f32.mxu0 0.0
        %540 = vmatmul.mubr.f32.gmra.mrb[0].mxu0 %v410
        %v541 = vpop.f32.mrb[0].mxu0
        %v542 = vadd.f32 %v385, %v541
        %v543 = vpop.f32.mrb[0].mxu0
        %544 = vmatprep.mubr.f32.mxu0 0.0
        %545 = vmatmul.mubr.f32.gmra.mrb[0].mxu0 %v413
        %v546 = vpop.f32.mrb[0].mxu0
        %v547 = vadd.f32 %v385, %v546
        %v548 = vpop.f32.mrb[0].mxu0
        %549 = vmatprep.mubr.f32.mxu0 0.0
        %550 = vmatmul.mubr.f32.gmra.mrb[0].mxu0 %v416
        %v551 = vpop.f32.mrb[0].mxu0
        %v552 = vadd.f32 %v385, %v551
        %v553 = vpop.f32.mrb[0].mxu0
        %554 = vmatprep.mubr.f32.mxu0 0.0
        %555 = vmatmul.mubr.f32.gmra.mrb[0].mxu0 %v419
        %v556 = vpop.f32.mrb[0].mxu0
        %v557 = vadd.f32 %v385, %v556
        %v558 = vpop.f32.mrb[0].mxu0
        %559 = vmatprep.mubr.f32.mxu0 0.0
        %560 = vmatmul.mubr.f32.gmra.mrb[0].mxu0 %v422
        %v561 = vpop.f32.mrb[0].mxu0
        %v562 = vadd.f32 %v385, %v561
        %v563 = vpop.f32.mrb[0].mxu0
        %564 = vmatprep.mubr.f32.mxu0 0.0
        %565 = vmatmul.mubr.f32.gmra.mrb[0].mxu0 %v425
        %v566 = vpop.f32.mrb[0].mxu0
        %v567 = vadd.f32 %v385, %v566
        %v568 = vpop.f32.mrb[0].mxu0
        %569 = vmatprep.mubr.f32.mxu0 0.0
        %570 = vmatmul.mubr.f32.gmra.mrb[0].mxu0 %v428
        %v571 = vpop.f32.mrb[0].mxu0
        %v572 = vadd.f32 %v385, %v571
        %v573 = vpop.f32.mrb[0].mxu0
        %574 = vmatprep.mubr.f32.mxu0 0.0
        %575 = vmatmul.mubr.f32.gmra.mrb[0].mxu0 %v431
        %v576 = vpop.f32.mrb[0].mxu0
        %v577 = vadd.f32 %v385, %v576
        %v578 = vpop.f32.mrb[0].mxu0
        %579 = vmatprep.mubr.f32.mxu0 0.0
        %580 = vmatmul.mubr.f32.gmra.mrb[0].mxu0 %v434
        %v581 = vpop.f32.mrb[0].mxu0
        %v582 = vadd.f32 %v385, %v581
        %v583 = vpop.f32.mrb[0].mxu0
        %584 = vdwg.mxu0
        %v585 = vsel %vm387, %v507, 0.0
        %v586 = vsel %vm387, %v512, 0.0
        %v587 = vadd.f32 %v585, %v586
        %v588 = vsel %vm387, %v517, 0.0
        %v589 = vadd.f32 %v587, %v588
        %v590 = vsel %vm387, %v522, 0.0
        %v591 = vadd.f32 %v589, %v590
        %v592 = vsel %vm387, %v527, 0.0
        %v593 = vadd.f32 %v591, %v592
        %v594 = vsel %vm387, %v532, 0.0
        %v595 = vadd.f32 %v593, %v594
        %v596 = vsel %vm387, %v537, 0.0
        %v597 = vadd.f32 %v595, %v596
        %v598 = vsel %vm387, %v542, 0.0
        %v599 = vadd.f32 %v597, %v598
        %v600 = vsel %vm387, %v547, 0.0
        %v601 = vadd.f32 %v599, %v600
        %v602 = vsel %vm387, %v552, 0.0
        %v603 = vadd.f32 %v601, %v602
        %v604 = vsel %vm387, %v557, 0.0
        %v605 = vadd.f32 %v603, %v604
        %v606 = vsel %vm387, %v562, 0.0
        %v607 = vadd.f32 %v605, %v606
        %v608 = vsel %vm387, %v567, 0.0
        %v609 = vadd.f32 %v607, %v608
        %v610 = vsel %vm387, %v572, 0.0
        %v611 = vadd.f32 %v609, %v610
        %v612 = vsel %vm387, %v577, 0.0
        %v613 = vadd.f32 %v611, %v612
        %v614 = vsel %vm387, %v582, 0.0
        %v615 = vadd.f32 %v613, %v614
        %v616 = vrot.slane %v615, 4
        %v617 = vadd.f32 %v615, %v616
        %v618 = vrot.slane %v617, 2
        %v619 = vadd.f32 %v617, %v618
        %v620 = vrot.slane %v619, 1
        %v621 = vadd.f32 %v619, %v620
        %vm622 = vcmask 24576
        %623 = vst.msk [vmem:[%s282] sm:$0x1] %vm622, %v621
        %v624 = vmul.f32 %v507, %v507
        %v625 = vmul.f32 %v512, %v512
        %v626 = vmul.f32 %v517, %v517
        %v627 = vmul.f32 %v522, %v522
        %v628 = vmul.f32 %v527, %v527
        %v629 = vmul.f32 %v532, %v532
        %v630 = vmul.f32 %v537, %v537
        %v631 = vmul.f32 %v542, %v542
        %v632 = vmul.f32 %v547, %v547
        %v633 = vmul.f32 %v552, %v552
        %v634 = vmul.f32 %v557, %v557
        %v635 = vmul.f32 %v562, %v562
        %v636 = vmul.f32 %v567, %v567
        %v637 = vmul.f32 %v572, %v572
        %v638 = vmul.f32 %v577, %v577
        %v639 = vmul.f32 %v582, %v582
        %v640 = vsel %vm387, %v624, 0.0
        %v641 = vsel %vm387, %v625, 0.0
        %v642 = vadd.f32 %v640, %v641
        %v643 = vsel %vm387, %v626, 0.0
        %v644 = vadd.f32 %v642, %v643
        %v645 = vsel %vm387, %v627, 0.0
        %v646 = vadd.f32 %v644, %v645
        %v647 = vsel %vm387, %v628, 0.0
        %v648 = vadd.f32 %v646, %v647
        %v649 = vsel %vm387, %v629, 0.0
        %v650 = vadd.f32 %v648, %v649
        %v651 = vsel %vm387, %v630, 0.0
        %v652 = vadd.f32 %v650, %v651
        %v653 = vsel %vm387, %v631, 0.0
        %v654 = vadd.f32 %v652, %v653
        %v655 = vsel %vm387, %v632, 0.0
        %v656 = vadd.f32 %v654, %v655
        %v657 = vsel %vm387, %v633, 0.0
        %v658 = vadd.f32 %v656, %v657
        %v659 = vsel %vm387, %v634, 0.0
        %v660 = vadd.f32 %v658, %v659
        %v661 = vsel %vm387, %v635, 0.0
        %v662 = vadd.f32 %v660, %v661
        %v663 = vsel %vm387, %v636, 0.0
        %v664 = vadd.f32 %v662, %v663
        %v665 = vsel %vm387, %v637, 0.0
        %v666 = vadd.f32 %v664, %v665
        %v667 = vsel %vm387, %v638, 0.0
        %v668 = vadd.f32 %v666, %v667
        %v669 = vsel %vm387, %v639, 0.0
        %v670 = vadd.f32 %v668, %v669
        %v671 = vrot.slane %v670, 4
        %v672 = vadd.f32 %v670, %v671
        %v673 = vrot.slane %v672, 2
        %v674 = vadd.f32 %v672, %v673
        %v675 = vrot.slane %v674, 1
        %v676 = vadd.f32 %v674, %v675
        %677 = vst.msk [vmem:[%s288] sm:$0x1] %vm622, %v676
        %678 = vst.msk [vmem:[%s299] sm:$0xff] %vm387, %v507
        %679 = vst.msk [vmem:[%s299 + $0x8] sm:$0xff] %vm387, %v512
        %680 = vst.msk [vmem:[%s299 + $0x10] sm:$0xff] %vm387, %v517
        %681 = vst.msk [vmem:[%s299 + $0x18] sm:$0xff] %vm387, %v522
        %682 = vst.msk [vmem:[%s299 + $0x20] sm:$0xff] %vm387, %v527
        %683 = vst.msk [vmem:[%s299 + $0x28] sm:$0xff] %vm387, %v532
        %684 = vst.msk [vmem:[%s299 + $0x30] sm:$0xff] %vm387, %v537
        %685 = vst.msk [vmem:[%s299 + $0x38] sm:$0xff] %vm387, %v542
        %686 = vst.msk [vmem:[%s299 + $0x40] sm:$0xff] %vm387, %v547
        %687 = vst.msk [vmem:[%s299 + $0x48] sm:$0xff] %vm387, %v552
        %688 = vst.msk [vmem:[%s299 + $0x50] sm:$0xff] %vm387, %v557
        %689 = vst.msk [vmem:[%s299 + $0x58] sm:$0xff] %vm387, %v562
        %690 = vst.msk [vmem:[%s299 + $0x60] sm:$0xff] %vm387, %v567
        %691 = vst.msk [vmem:[%s299 + $0x68] sm:$0xff] %vm387, %v572
        %692 = vst.msk [vmem:[%s299 + $0x70] sm:$0xff] %vm387, %v577
        %693 = vst.msk [vmem:[%s299 + $0x78] sm:$0xff] %vm387, %v582
        %s694 = smul.u32 16, %s25
        %p695 = scmp.lt.s32.totalorder %s694, 63
        %s696 = scalar_select %p695, %s694, 63
        %s697 = smul.addr %s696, 8
        %s698 = scalar_lea.vmem %s5, %s697
        %s699 = sand.u32 %s169, 1
        %s700 = scalar_lea.sflag [#allocation3], %s699
        %s701 = sand.u32 %s169, 1
        %s702 = scalar_lea.vmem [#allocation2], %s701
        %s703 = sand.u32 %s195, 1
        %s704 = scalar_lea.sflag [#allocation5], %s703
        %s705 = sand.u32 %s195, 1
        %s706 = scalar_lea.vmem [#allocation4], %s705
        // Predicated region
        $region41: #{tpu_custom_call.1} parent=39 // pred_check
          %p707 = pneg %p153
        $region42: #{tpu_custom_call.1} parent=39 // pred_check_branch
          %709 = sbr.rel (%p707) target = $region44
        $region43: #{tpu_custom_call.1} parent=39 // pred_region
          %s710 = smul.u32 16, %s25
        $region44: #{tpu_custom_call.1} parent=39 // pred_fallthru
          _
        // Predicated region
        $region45: #{tpu_custom_call.1} parent=39 // pred_check
          %p711 = pneg %p179
        $region46: #{tpu_custom_call.1} parent=39 // pred_check_branch
          %713 = sbr.rel (%p711) target = $region48
        $region47: #{tpu_custom_call.1} parent=39 // pred_region
          %s715 = ssub.s32 16, 16
          %716 = vsyncadd %s700, %s715
          %s717 = smul.addr %s25, 16
          %s718 = scalar_lea.hbm %s6, %s717
          %s720 = sshll.u32 %s702, 4
          %s721 = int_to_ptr.vmem [resolvable:$true] %s720
          %723 = dma.vmem_to_hbm [thread:$0]  %s721, 16, %s718, %s700
        $region48: #{tpu_custom_call.1} parent=39 // pred_fallthru
          _
        // Predicated region
        $region49: #{tpu_custom_call.1} parent=39 // pred_check
          %p724 = pneg %p205
        $region50: #{tpu_custom_call.1} parent=39 // pred_check_branch
          %726 = sbr.rel (%p724) target = $region52
        $region51: #{tpu_custom_call.1} parent=39 // pred_region
          %s728 = ssub.s32 16, 16
          %729 = vsyncadd %s704, %s728
          %s730 = smul.addr %s25, 16
          %s731 = scalar_lea.hbm %s7, %s730
          %s733 = sshll.u32 %s706, 4
          %s734 = int_to_ptr.vmem [resolvable:$true] %s733
          %736 = dma.vmem_to_hbm [thread:$0]  %s734, 16, %s731, %s704
        $region52: #{tpu_custom_call.1} parent=39 // pred_fallthru
          _
      $region40: #{tpu_custom_call.1} parent=5 // pred_fallthru
        _
      %p737 = scmp.le.s32.totalorder 2, %s20
      // Predicated region
      $region53: #{tpu_custom_call.1} parent=5 // pred_check
        %p738 = pneg %p737
      $region54: #{tpu_custom_call.1} parent=5 // pred_check_branch
        %740 = sbr.rel (%p738) target = $region56
      $region55: #{tpu_custom_call.1} parent=5 // pred_region
        %s741 = ssub.s32 %s20, 2
        // Predicated region
        $region57: #{tpu_custom_call.1} parent=55 // pred_check
          %p742 = pneg %p159
        $region58: #{tpu_custom_call.1} parent=55 // pred_check_branch
          %744 = sbr.rel (%p742) target = $region60
        $region59: #{tpu_custom_call.1} parent=55 // pred_region
          %s745 = smul.u32 16, %s26
          %p746 = scmp.lt.s32.totalorder %s745, 63
          %s747 = scalar_select %p746, %s745, 63
          %s748 = smul.addr %s747, 8
          %s749 = scalar_lea.vmem %s5, %s748
        $region60: #{tpu_custom_call.1} parent=55 // pred_fallthru
          _
        // Predicated region
        $region61: #{tpu_custom_call.1} parent=55 // pred_check
          %p750 = pneg %p185
        $region62: #{tpu_custom_call.1} parent=55 // pred_check_branch
          %752 = sbr.rel (%p750) target = $region64
        $region63: #{tpu_custom_call.1} parent=55 // pred_region
          %s753 = sand.u32 %s170, 1
          %s754 = scalar_lea.sflag [#allocation3], %s753
          %s755 = sand.u32 %s170, 1
          %s756 = scalar_lea.vmem [#allocation2], %s755
          %757 = dma.done %s754, 16
        $region64: #{tpu_custom_call.1} parent=55 // pred_fallthru
          _
        // Predicated region
        $region65: #{tpu_custom_call.1} parent=55 // pred_check
          %p758 = pneg %p211
        $region66: #{tpu_custom_call.1} parent=55 // pred_check_branch
          %760 = sbr.rel (%p758) target = $region68
        $region67: #{tpu_custom_call.1} parent=55 // pred_region
          %s761 = sand.u32 %s196, 1
          %s762 = scalar_lea.sflag [#allocation5], %s761
          %s763 = sand.u32 %s196, 1
          %s764 = scalar_lea.vmem [#allocation4], %s763
          %765 = dma.done %s762, 16
        $region68: #{tpu_custom_call.1} parent=55 // pred_fallthru
          _
      $region56: #{tpu_custom_call.1} parent=5 // pred_fallthru
        _
    $region6: #{tpu_custom_call.1} parent=1 // loop_footer
      %s24 = sadd.s32 1, %s20
    $region7: #{tpu_custom_call.1} parent=1 // loop_footer_branch
      %19 = sbr.rel target = $region3
    $region8: #{tpu_custom_call.1} parent=1 // loop_exit
      _
    %766 = vsyncpa [#allocation3], 1
    %s767 = scalar_lea.sflag [#allocation3], 1
    %768 = vsyncpa %s767, 1
    %769 = vsyncpa [#allocation5], 1
    %s770 = scalar_lea.sflag [#allocation5], 1
    %771 = vsyncpa %s770, 1

</llo_original>
